<compile_context>
chip_gen: v5e
topology: v5e:2x2
jax: 0.10.0
libtpu: 0.0.40
codegen_flags: <defaults>
</compile_context>

<pallas_src>
import functools

import jax
import jax.numpy as jnp
import numpy as np
from jax import lax
from jax.experimental import pallas as pl
from jax.experimental.pallas import tpu as pltpu


def _conv_block_kernel(x_ref, w_ref, b_ref, o_ref, *, w_pad, cin, k_pad):
    # x_ref: (Cin, Lp)   flattened zero-padded image (channel-major, batch squeezed)
    # w_ref: (Cout, Kp)  folded 5x5 weights, rows ordered (ki, kj, ci), K zero-padded
    # b_ref: (Cout, 1)   folded bias
    # o_ref: (Cout, L)   lane-dense output, L = H * W_pad (multiple of 128)
    L = o_ref.shape[-1]
    x = x_ref[...]                                      # loaded once; a few vregs

    # Build patches pre-transposed as (Kp, L): tap (ki, kj) is a static lane
    # window of the flat padded image at offset ki*W_pad + kj.  Spatial stays
    # in the lane axis, so there is no lane-sparse packing and no transpose.
    parts = [x[:, ki * w_pad + kj: ki * w_pad + kj + L]
             for ki in range(5) for kj in range(5)]     # 25 x (Cin, L)
    pad_rows = k_pad - 25 * cin
    if pad_rows > 0:
        parts.append(jnp.zeros((pad_rows, L), jnp.float32))
    patches = jnp.concatenate(parts, axis=0)            # (Kp, L)

    out = jnp.dot(w_ref[...], patches,
                  preferred_element_type=jnp.float32)   # (Cout, L), single MXU dot
    o_ref[...] = (out + b_ref[...]).astype(o_ref.dtype)


def convolution_block_both(x_nchw, w3, b3, w5, b5):
    """x_nchw: (N, Cin, H, W); w3: (Cout, Cin, 3, 3); w5: (Cout, Cin, 5, 5)."""
    N, Cin, H, W = x_nchw.shape
    Cout = w3.shape[0]

    # --- fold conv3x3 into conv5x5 (same input, stride 1, same pad, summed) --
    w3f = w3.astype(jnp.float32)
    w5f = w5.astype(jnp.float32)
    w_eff = w5f + jnp.pad(w3f, ((0, 0), (0, 0), (1, 1), (1, 1)))   # (Co,Ci,5,5)
    K = 25 * Cin
    Kp = ((K + 127) // 128) * 128                                  # pad K to 128
    # Row order (ki, kj, ci) must match the in-kernel patch construction.
    w_rows = jnp.transpose(w_eff, (2, 3, 1, 0)).reshape(K, Cout)   # (K, Cout)
    w_t = jnp.zeros((Cout, Kp), jnp.float32).at[:, :K].set(w_rows.T)
    b_eff = (b3 + b5).astype(jnp.float32).reshape(Cout, 1)

    # --- channel-major padding (no NCHW->NHWC transpose) ---------------------
    # left/top pad = 2 (folded 5x5 "same" pad); right pad chosen so that
    # H*W_pad is a multiple of 128 (lane-dense output block); bottom gets one
    # extra zero row so the largest tap window (offset 4*W_pad+4) stays in
    # bounds of the flattened image.
    W_pad = W + 4
    while (H * W_pad) % 128 != 0:
        W_pad += 1                       # terminates by W_pad % 128 == 0 at worst
    x_pad = jnp.pad(x_nchw.astype(jnp.float32),
                    ((0, 0), (0, 0), (2, 3), (2, W_pad - W - 2)))
    Lp = (H + 5) * W_pad
    L = H * W_pad
    x_flat = x_pad.reshape(N, Cin, Lp)

    # TODO(synk): for large H*W*Cin (v7x 64 MiB VMEM) switch the x spec to
    # pl.ANY + halo-blocked make_async_copy double buffering; for N == 1 add a
    # second parallel grid axis (e.g. Cout split) so both v7x TCs stay busy.
    kernel = functools.partial(_conv_block_kernel, w_pad=W_pad, cin=Cin, k_pad=Kp)
    out = pl.pallas_call(
        kernel,
        out_shape=jax.ShapeDtypeStruct((N, Cout, L), jnp.float32),
        grid_spec=pltpu.PrefetchScalarGridSpec(
            num_scalar_prefetch=0,
            grid=(N,),
            in_specs=[
                pl.BlockSpec((None, Cin, Lp), lambda n: (n, 0, 0)),   # squeezed batch
                pl.BlockSpec((Cout, Kp), lambda n: (0, 0)),
                pl.BlockSpec((Cout, 1), lambda n: (0, 0)),
            ],
            out_specs=pl.BlockSpec((None, Cout, L), lambda n: (n, 0, 0)),
        ),
        compiler_params=pltpu.CompilerParams(
            dimension_semantics=("parallel",)),
    )(x_flat, w_t, b_eff)

    # (N, Cout, H*W_pad) -> crop the W valid columns of each output row.
    return out.reshape(N, Cout, H, W_pad)[:, :, :, :W]


def _reference(x_nchw, w3, b3, w5, b5):
    dn = ("NCHW", "OIHW", "NCHW")
    y3 = lax.conv_general_dilated(x_nchw, w3, (1, 1), ((1, 1), (1, 1)),
                                  dimension_numbers=dn) + b3[None, :, None, None]
    y5 = lax.conv_general_dilated(x_nchw, w5, (1, 1), ((2, 2), (2, 2)),
                                  dimension_numbers=dn) + b5[None, :, None, None]
    return y3 + y5


if __name__ == "__main__":
    key = jax.random.PRNGKey(0)
    N, Cin, H, W = 2, 4, 16, 16
    Cout = 32

    k_x, k_w3, k_b3, k_w5, k_b5 = jax.random.split(key, 5)
    x = jax.random.normal(k_x, (N, Cin, H, W), dtype=jnp.float32)

    # Deterministic PyTorch-like init (uniform in +/- 1/sqrt(fan_in)).
    bound3 = 1.0 / np.sqrt(Cin * 3 * 3)
    bound5 = 1.0 / np.sqrt(Cin * 5 * 5)
    w3 = jax.random.uniform(k_w3, (Cout, Cin, 3, 3), jnp.float32, -bound3, bound3)
    b3 = jax.random.uniform(k_b3, (Cout,), jnp.float32, -bound3, bound3)
    w5 = jax.random.uniform(k_w5, (Cout, Cin, 5, 5), jnp.float32, -bound5, bound5)
    b5 = jax.random.uniform(k_b5, (Cout,), jnp.float32, -bound5, bound5)

    y = jax.block_until_ready(convolution_block_both(x, w3, b3, w5, b5))
    y_ref = jax.block_until_ready(_reference(x, w3, b3, w5, b5))
    np.testing.assert_allclose(np.asarray(y), np.asarray(y_ref),
                               atol=1e-4, rtol=1e-4)
    print("KERNEL_OK")
</pallas_src>

<mosaic_0001>
module attributes {stable_mosaic.version = 11 : i64} {
  func.func @_conv_block_kernel(%arg0: i32, %arg1: memref<1x4x504xf32, #tpu.memory_space<vmem>>, %arg2: memref<32x128xf32, #tpu.memory_space<vmem>>, %arg3: memref<32x1xf32, #tpu.memory_space<vmem>>, %arg4: memref<1x32x384xf32, #tpu.memory_space<vmem>>) attributes {dimension_semantics = [#tpu.dimension_semantics<parallel>], iteration_bounds = array<i64: 2>, scalar_prefetch = 0 : i64, scratch_operands = 0 : i64, tpu.core_type = #tpu.core_type<tc>, window_params = [{transform_indices = @transform_0, window_bounds = array<i64: 1, 4, 504>}, {pipeline_mode = #tpu.pipeline_mode<synchronous>, transform_indices = @transform_1, window_bounds = array<i64: 32, 128>}, {pipeline_mode = #tpu.pipeline_mode<synchronous>, transform_indices = @transform_2, window_bounds = array<i64: 32, 1>}, {transform_indices = @transform_3, window_bounds = array<i64: 1, 32, 384>}]} {
    %c0 = arith.constant 0 : index
    %c0_0 = arith.constant 0 : index
    %c0_1 = arith.constant 0 : index
    %0 = vector.load %arg1[%c0, %c0_0, %c0_1] : memref<1x4x504xf32, #tpu.memory_space<vmem>>, vector<1x4x504xf32>
    %1 = vector.shape_cast %0 : vector<1x4x504xf32> to vector<4x504xf32>
    %2 = vector.extract_strided_slice %1 {offsets = [0, 0], sizes = [4, 384], strides = [1, 1]} : vector<4x504xf32> to vector<4x384xf32>
    %3 = vector.extract_strided_slice %1 {offsets = [0, 1], sizes = [4, 384], strides = [1, 1]} : vector<4x504xf32> to vector<4x384xf32>
    %4 = vector.extract_strided_slice %1 {offsets = [0, 2], sizes = [4, 384], strides = [1, 1]} : vector<4x504xf32> to vector<4x384xf32>
    %5 = vector.extract_strided_slice %1 {offsets = [0, 3], sizes = [4, 384], strides = [1, 1]} : vector<4x504xf32> to vector<4x384xf32>
    %6 = vector.extract_strided_slice %1 {offsets = [0, 4], sizes = [4, 384], strides = [1, 1]} : vector<4x504xf32> to vector<4x384xf32>
    %7 = vector.extract_strided_slice %1 {offsets = [0, 24], sizes = [4, 384], strides = [1, 1]} : vector<4x504xf32> to vector<4x384xf32>
    %8 = vector.extract_strided_slice %1 {offsets = [0, 25], sizes = [4, 384], strides = [1, 1]} : vector<4x504xf32> to vector<4x384xf32>
    %9 = vector.extract_strided_slice %1 {offsets = [0, 26], sizes = [4, 384], strides = [1, 1]} : vector<4x504xf32> to vector<4x384xf32>
    %10 = vector.extract_strided_slice %1 {offsets = [0, 27], sizes = [4, 384], strides = [1, 1]} : vector<4x504xf32> to vector<4x384xf32>
    %11 = vector.extract_strided_slice %1 {offsets = [0, 28], sizes = [4, 384], strides = [1, 1]} : vector<4x504xf32> to vector<4x384xf32>
    %12 = vector.extract_strided_slice %1 {offsets = [0, 48], sizes = [4, 384], strides = [1, 1]} : vector<4x504xf32> to vector<4x384xf32>
    %13 = vector.extract_strided_slice %1 {offsets = [0, 49], sizes = [4, 384], strides = [1, 1]} : vector<4x504xf32> to vector<4x384xf32>
    %14 = vector.extract_strided_slice %1 {offsets = [0, 50], sizes = [4, 384], strides = [1, 1]} : vector<4x504xf32> to vector<4x384xf32>
    %15 = vector.extract_strided_slice %1 {offsets = [0, 51], sizes = [4, 384], strides = [1, 1]} : vector<4x504xf32> to vector<4x384xf32>
    %16 = vector.extract_strided_slice %1 {offsets = [0, 52], sizes = [4, 384], strides = [1, 1]} : vector<4x504xf32> to vector<4x384xf32>
    %17 = vector.extract_strided_slice %1 {offsets = [0, 72], sizes = [4, 384], strides = [1, 1]} : vector<4x504xf32> to vector<4x384xf32>
    %18 = vector.extract_strided_slice %1 {offsets = [0, 73], sizes = [4, 384], strides = [1, 1]} : vector<4x504xf32> to vector<4x384xf32>
    %19 = vector.extract_strided_slice %1 {offsets = [0, 74], sizes = [4, 384], strides = [1, 1]} : vector<4x504xf32> to vector<4x384xf32>
    %20 = vector.extract_strided_slice %1 {offsets = [0, 75], sizes = [4, 384], strides = [1, 1]} : vector<4x504xf32> to vector<4x384xf32>
    %21 = vector.extract_strided_slice %1 {offsets = [0, 76], sizes = [4, 384], strides = [1, 1]} : vector<4x504xf32> to vector<4x384xf32>
    %22 = vector.extract_strided_slice %1 {offsets = [0, 96], sizes = [4, 384], strides = [1, 1]} : vector<4x504xf32> to vector<4x384xf32>
    %23 = vector.extract_strided_slice %1 {offsets = [0, 97], sizes = [4, 384], strides = [1, 1]} : vector<4x504xf32> to vector<4x384xf32>
    %24 = vector.extract_strided_slice %1 {offsets = [0, 98], sizes = [4, 384], strides = [1, 1]} : vector<4x504xf32> to vector<4x384xf32>
    %25 = vector.extract_strided_slice %1 {offsets = [0, 99], sizes = [4, 384], strides = [1, 1]} : vector<4x504xf32> to vector<4x384xf32>
    %26 = vector.extract_strided_slice %1 {offsets = [0, 100], sizes = [4, 384], strides = [1, 1]} : vector<4x504xf32> to vector<4x384xf32>
    %cst = arith.constant 0.000000e+00 : f32
    %27 = vector.broadcast %cst : f32 to vector<28x384xf32>
    %28 = tpu.concatenate %2, %3, %4, %5, %6, %7, %8, %9, %10, %11, %12, %13, %14, %15, %16, %17 in 0 : vector<4x384xf32>, vector<4x384xf32>, vector<4x384xf32>, vector<4x384xf32>, vector<4x384xf32>, vector<4x384xf32>, vector<4x384xf32>, vector<4x384xf32>, vector<4x384xf32>, vector<4x384xf32>, vector<4x384xf32>, vector<4x384xf32>, vector<4x384xf32>, vector<4x384xf32>, vector<4x384xf32>, vector<4x384xf32> -> vector<64x384xf32>
    %29 = tpu.concatenate %18, %19, %20, %21, %22, %23, %24, %25, %26, %27 in 0 : vector<4x384xf32>, vector<4x384xf32>, vector<4x384xf32>, vector<4x384xf32>, vector<4x384xf32>, vector<4x384xf32>, vector<4x384xf32>, vector<4x384xf32>, vector<4x384xf32>, vector<28x384xf32> -> vector<64x384xf32>
    %30 = tpu.concatenate %28, %29 in 0 : vector<64x384xf32>, vector<64x384xf32> -> vector<128x384xf32>
    %c0_2 = arith.constant 0 : index
    %c0_3 = arith.constant 0 : index
    %31 = vector.load %arg2[%c0_2, %c0_3] : memref<32x128xf32, #tpu.memory_space<vmem>>, vector<32x128xf32>
    %cst_4 = arith.constant dense<0.000000e+00> : vector<32x384xf32>
    %32 = tpu.matmul %31, %30, %cst_4 {dimension_numbers = #tpu.dot_dimension_numbers<[1], [0], [0], [1], [0, 0, 1, 1], [], []>} : vector<32x128xf32>, vector<128x384xf32>, vector<32x384xf32> -> vector<32x384xf32>
    %c0_5 = arith.constant 0 : index
    %c0_6 = arith.constant 0 : index
    %33 = vector.load %arg3[%c0_5, %c0_6] : memref<32x1xf32, #tpu.memory_space<vmem>>, vector<32x1xf32>
    %34 = vector.broadcast %33 : vector<32x1xf32> to vector<32x384xf32>
    %35 = arith.addf %32, %34 : vector<32x384xf32>
    %c0_7 = arith.constant 0 : index
    %c0_8 = arith.constant 0 : index
    %c0_9 = arith.constant 0 : index
    %36 = vector.load %arg4[%c0_7, %c0_8, %c0_9] : memref<1x32x384xf32, #tpu.memory_space<vmem>>, vector<1x32x384xf32>
    %37 = vector.shape_cast %36 : vector<1x32x384xf32> to vector<32x384xf32>
    %38 = vector.shape_cast %35 : vector<32x384xf32> to vector<1x32x384xf32>
    tpu.vector_store %arg4[%c0_7, %c0_8, %c0_9], %38 {strides = array<i32>} : memref<1x32x384xf32, #tpu.memory_space<vmem>>, vector<1x32x384xf32>,
    return
  }
  func.func @transform_0(%arg0: i32) -> (i32, i32, i32) {
    %c0_i32 = arith.constant 0 : i32
    %c0_i32_0 = arith.constant 0 : i32
    %c0_i32_1 = arith.constant 0 : i32
    return %arg0, %c0_i32, %c0_i32_0 : i32, i32, i32
  }
  func.func @transform_1(%arg0: i32) -> (i32, i32) {
    %c0_i32 = arith.constant 0 : i32
    %c0_i32_0 = arith.constant 0 : i32
    %c0_i32_1 = arith.constant 0 : i32
    return %c0_i32, %c0_i32_0 : i32, i32
  }
  func.func @transform_2(%arg0: i32) -> (i32, i32) {
    %c0_i32 = arith.constant 0 : i32
    %c0_i32_0 = arith.constant 0 : i32
    %c0_i32_1 = arith.constant 0 : i32
    return %c0_i32, %c0_i32_0 : i32, i32
  }
  func.func @transform_3(%arg0: i32) -> (i32, i32, i32) {
    %c0_i32 = arith.constant 0 : i32
    %c0_i32_0 = arith.constant 0 : i32
    %c0_i32_1 = arith.constant 0 : i32
    return %arg0, %c0_i32, %c0_i32_0 : i32, i32, i32
  }
}

</mosaic_0001>

<llo_original>
// kernel: tpu_custom_call.1
$region0: #{tpu_custom_call.1}
  #allocation0 [shape = 'u32[]', space=smem, size = 0x4, offset = 0x4, fixed_abs, tag = 'smem constant byte address 0x4 - core index']
  #allocation1 [shape = 'u32[72,128]{1,0:T(1,128)}', space=vmem, size = 0x9000, scoped, tag = 'internal scratch']
  %s0 = inlined_call_operand.vmem [shape: f32[2,4,504], index: 0, kind: input, shape index: {}]
  %s1 = inlined_call_operand.hbm [shape: f32[32,128], index: 1, kind: input, shape index: {}]
  %s2 = inlined_call_operand.vmem [shape: f32[32,1], index: 2, kind: input, shape index: {}]
  %s3 = inlined_call_operand.hbm [shape: f32[2,32,384], index: 3, kind: output, shape index: {}]
  %s4 = sld [smem:[#allocation0]]
  $region49: #{tpu_custom_call.1} parent=0
    _
  %s6 = ssub.s32 1, %s4
  %s7 = scalar_select 0, %s6, %s4
  $region1: #{tpu_custom_call.1} parent=0
    #allocation2 [shape = 'u8[16384]{0}', space=vmem, size = 0x4000, scoped, tag = 'input window, operand 1, single buffered']
    #allocation3 [shape = 's32[2]{0}', space=sflag, size = 0x8, scoped, tag = 'scoped memory for tpu_custom_call.1']
    #allocation4 [shape = 's32[2]{0}', space=sflag, size = 0x8, scoped, tag = 'scoped memory for tpu_custom_call.1']
    #allocation5 [shape = 'u8[98304]{0}', space=vmem, size = 0x18000, scoped, tag = 'output window, operand 0']
    %8 = vsyncpa [#allocation3], 0
    %9 = vsyncpa [#allocation4], 0
    %s10 = scalar_lea.sflag [#allocation4], 1
    %11 = vsyncpa %s10, 0
    loop: start=0, step=1, limit=4
    $region2: #{tpu_custom_call.1} parent=1 // loop_pre_header
      _
    $region3: #{tpu_custom_call.1} parent=1 // loop_header
      %s13 = sphi 0, %s17
      %p14 = scmp.ge.s32.totalorder %s13, 4
      %s23 = sphi 0, %s25
      %s26 = sphi 0, %s23
      %s27 = sphi 0, %s26
      %s43 = sphi 0, %s27
      %s47 = sphi 0, %s47
      %s49 = sphi 0, %s47
      %s50 = sphi 0, %s49
      %s64 = sphi 0, %s50
      %s68 = sphi 0, %s68
      %s70 = sphi 0, %s68
      %s71 = sphi 0, %s70
      %s85 = sphi 0, %s71
      %s91 = sphi 0, %s93
      %s94 = sphi 0, %s91
      %s95 = sphi 0, %s94
      %s111 = sphi 0, %s95
    $region4: #{tpu_custom_call.1} parent=1 // loop_header_branch
      %16 = sbr.rel (%p14) target = $region8
    $region5: #{tpu_custom_call.1} parent=1 // loop_body
      %s18 = ssub.s32 %s13, 1
      %s19 = ssub.s32 %s13, 2
      %s20 = sadd.s32 %s13, 1
      %s21 = ssub.s32 %s13, %s20
      %p22 = scmp.eq.s32.totalorder %s21, 0
      %s24 = sadd.s32 %s23, 1
      %s25 = scalar_select %p22, %s23, %s24
      %p28 = pneg %p22
      %p29 = scmp.eq.s32.totalorder %s13, 1
      %p30 = por %p28, %p29
      %p31 = scmp.ne.s32.totalorder %s23, %s26
      %p32 = scmp.eq.s32.totalorder %s13, 0
      %p33 = por %p31, %p32
      %p34 = scmp.ne.s32.totalorder %s23, %s26
      %p35 = scmp.eq.s32.totalorder %s18, 1
      %p36 = por %p34, %p35
      %p37 = scmp.ne.s32.totalorder %s26, %s27
      %p38 = scmp.eq.s32.totalorder %s18, 0
      %p39 = por %p37, %p38
      %p40 = scmp.ne.s32.totalorder %s26, %s27
      %p41 = scmp.eq.s32.totalorder %s19, 1
      %p42 = por %p40, %p41
      %p44 = scmp.ne.s32.totalorder %s27, %s43
      %p45 = scmp.eq.s32.totalorder %s19, 0
      %p46 = por %p44, %p45
      %s48 = sadd.s32 %s47, 1
      %p51 = scmp.eq.s32.totalorder %s13, 1
      %p52 = scmp.ne.s32.totalorder %s47, %s49
      %p53 = scmp.eq.s32.totalorder %s13, 0
      %p54 = por %p52, %p53
      %p55 = scmp.ne.s32.totalorder %s47, %s49
      %p56 = scmp.eq.s32.totalorder %s18, 1
      %p57 = por %p55, %p56
      %p58 = scmp.ne.s32.totalorder %s49, %s50
      %p59 = scmp.eq.s32.totalorder %s18, 0
      %p60 = por %p58, %p59
      %p61 = scmp.ne.s32.totalorder %s49, %s50
      %p62 = scmp.eq.s32.totalorder %s19, 1
      %p63 = por %p61, %p62
      %p65 = scmp.ne.s32.totalorder %s50, %s64
      %p66 = scmp.eq.s32.totalorder %s19, 0
      %p67 = por %p65, %p66
      %s69 = sadd.s32 %s68, 1
      %p72 = scmp.eq.s32.totalorder %s13, 1
      %p73 = scmp.ne.s32.totalorder %s68, %s70
      %p74 = scmp.eq.s32.totalorder %s13, 0
      %p75 = por %p73, %p74
      %p76 = scmp.ne.s32.totalorder %s68, %s70
      %p77 = scmp.eq.s32.totalorder %s18, 1
      %p78 = por %p76, %p77
      %p79 = scmp.ne.s32.totalorder %s70, %s71
      %p80 = scmp.eq.s32.totalorder %s18, 0
      %p81 = por %p79, %p80
      %p82 = scmp.ne.s32.totalorder %s70, %s71
      %p83 = scmp.eq.s32.totalorder %s19, 1
      %p84 = por %p82, %p83
      %p86 = scmp.ne.s32.totalorder %s71, %s85
      %p87 = scmp.eq.s32.totalorder %s19, 0
      %p88 = por %p86, %p87
      %s89 = ssub.s32 %s13, %s20
      %p90 = scmp.eq.s32.totalorder %s89, 0
      %s92 = sadd.s32 %s91, 1
      %s93 = scalar_select %p90, %s91, %s92
      %p96 = pneg %p90
      %p97 = scmp.eq.s32.totalorder %s13, 1
      %p98 = por %p96, %p97
      %p99 = scmp.ne.s32.totalorder %s91, %s94
      %p100 = scmp.eq.s32.totalorder %s13, 0
      %p101 = por %p99, %p100
      %p102 = scmp.ne.s32.totalorder %s91, %s94
      %p103 = scmp.eq.s32.totalorder %s18, 1
      %p104 = por %p102, %p103
      %p105 = scmp.ne.s32.totalorder %s94, %s95
      %p106 = scmp.eq.s32.totalorder %s18, 0
      %p107 = por %p105, %p106
      %p108 = scmp.ne.s32.totalorder %s94, %s95
      %p109 = scmp.eq.s32.totalorder %s19, 1
      %p110 = por %p108, %p109
      %p112 = scmp.ne.s32.totalorder %s95, %s111
      %p113 = scmp.eq.s32.totalorder %s19, 0
      %p114 = por %p112, %p113
      %p115 = scmp.le.s32.totalorder 1, %s13
      %p116 = scmp.lt.s32.totalorder %s13, 3
      %p117 = pnand %p115, %p116
      %p118 = pneg %p117
      // Predicated region
      $region9: #{tpu_custom_call.1} parent=5 // pred_check
        _
      $region10: #{tpu_custom_call.1} parent=5 // pred_check_branch
        %120 = sbr.rel (%p117) target = $region12
      $region11: #{tpu_custom_call.1} parent=5 // pred_region
        %s121 = ssub.s32 %s13, 1
        // Predicated region
        $region13: #{tpu_custom_call.1} parent=11 // pred_check
          %p122 = pneg %p60
        $region14: #{tpu_custom_call.1} parent=11 // pred_check_branch
          %124 = sbr.rel (%p122) target = $region16
        $region15: #{tpu_custom_call.1} parent=11 // pred_region
          %126 = vsyncadd [#allocation3], 0
          %s127 = sshll.u32 %s1, 4
          %s128 = int_to_ptr.hbm [resolvable:$true] %s127
          %s129 = sshll.u32 [#allocation2], 4
          %s130 = int_to_ptr.vmem [resolvable:$true] %s129
          %135 = dma.hbm_to_vmem [thread:$0]  %s128, 512, %s130, [#allocation3], 128, 128, 8
        $region16: #{tpu_custom_call.1} parent=11 // pred_fallthru
          _
        // Predicated region
        $region17: #{tpu_custom_call.1} parent=11 // pred_check
          %p136 = pneg %p81
        $region18: #{tpu_custom_call.1} parent=11 // pred_check_branch
          %138 = sbr.rel (%p136) target = $region20
        $region19: #{tpu_custom_call.1} parent=11 // pred_region
          _
        $region20: #{tpu_custom_call.1} parent=11 // pred_fallthru
          _
      $region12: #{tpu_custom_call.1} parent=5 // pred_fallthru
        _
      %p139 = scmp.lt.s32.totalorder %s13, 2
      // Predicated region
      $region21: #{tpu_custom_call.1} parent=5 // pred_check
        %p140 = pneg %p139
      $region22: #{tpu_custom_call.1} parent=5 // pred_check_branch
        %142 = sbr.rel (%p140) target = $region24
      $region23: #{tpu_custom_call.1} parent=5 // pred_region
        // Predicated region
        $region25: #{tpu_custom_call.1} parent=23 // pred_check
          %p143 = pneg %p33
        $region26: #{tpu_custom_call.1} parent=23 // pred_check_branch
          %145 = sbr.rel (%p143) target = $region28
        $region27: #{tpu_custom_call.1} parent=23 // pred_region
          %p146 = scmp.lt.s32.totalorder %s13, 1
          %s147 = scalar_select %p146, %s13, 1
          %s148 = smul.addr %s147, 4
          %s149 = smul.addr %s148, 4
          %s150 = scalar_lea.vmem %s0, %s149
        $region28: #{tpu_custom_call.1} parent=23 // pred_fallthru
          _
      $region24: #{tpu_custom_call.1} parent=5 // pred_fallthru
        _
      %p151 = scmp.le.s32.totalorder 1, %s13
      %p152 = scmp.lt.s32.totalorder %s13, 3
      %p153 = pnand %p151, %p152
      %p154 = pneg %p153
      // Predicated region
      $region29: #{tpu_custom_call.1} parent=5 // pred_check
        _
      $region30: #{tpu_custom_call.1} parent=5 // pred_check_branch
        %156 = sbr.rel (%p153) target = $region32
      $region31: #{tpu_custom_call.1} parent=5 // pred_region
        %s157 = ssub.s32 %s13, 1
        // Predicated region
        $region33: #{tpu_custom_call.1} parent=31 // pred_check
          %p158 = pneg %p60
        $region34: #{tpu_custom_call.1} parent=31 // pred_check_branch
          %160 = sbr.rel (%p158) target = $region36
        $region35: #{tpu_custom_call.1} parent=31 // pred_region
          %162 = dma.done [#allocation3], 512
        $region36: #{tpu_custom_call.1} parent=31 // pred_fallthru
          _
        %p163 = scmp.lt.s32.totalorder %s18, 1
        %s164 = scalar_select %p163, %s18, 1
        %s165 = smul.addr %s164, 4
        %s166 = smul.addr %s165, 4
        %s167 = scalar_lea.vmem %s0, %s166
        %p168 = pneg %p39
        %p169 = pneg %p36
        %p170 = pneg %p60
        %p171 = pneg %p57
        %p172 = pneg %p81
        %p173 = pneg %p78
        %p174 = pneg %p107
        %p175 = pneg %p104
        %s176 = sand.u32 %s94, 1
        %s177 = scalar_lea.sflag [#allocation4], %s176
        %s178 = sand.u32 %s94, 1
        %s179 = smul.addr %s178, 96
        %s180 = scalar_lea.vmem [#allocation5], %s179
        %p181 = scmp.lt.s32.totalorder %s18, 1
        %s182 = scalar_select %p181, %s18, 1
        %s183 = smul.addr %s182, 4
        %s184 = smul.addr %s183, 4
        %s185 = scalar_lea.vmem %s0, %s184
        %v186 = vld [vmem:[%s185] sm:$0xff]
        %v187 = vld [vmem:[%s185 + $0x8] sm:$0xff]
        %190 = vst [vmem:[#allocation1] ss:$2 sm:$0xff] %v186
        %s191 = scalar_lea.vmem [#allocation1], 16
        %192 = vst [vmem:[%s191] ss:$2 sm:$0xff] %v187
        %v193 = vld.sshfl [vmem:[#allocation1] sm:$0xff pattern:$0x75316420]
        %v194 = vld.sshfl [vmem:[#allocation1 + $0x8] sm:$0xff pattern:$0x75316420]
        %v195 = vld.sshfl [vmem:[#allocation1 + $0x10] sm:$0xff pattern:$0x75316420]
        %s199 = scalar_lea.vmem [#allocation1], 1
        %200 = vst [vmem:[%s199] ss:$2 sm:$0xff] %v186
        %s201 = scalar_lea.vmem [#allocation1], 17
        %202 = vst [vmem:[%s201] ss:$2 sm:$0xff] %v187
        %v203 = vld.sshfl [vmem:[#allocation1] sm:$0xff pattern:$0x75316420]
        %v204 = vld.sshfl [vmem:[#allocation1 + $0x8] sm:$0xff pattern:$0x75316420]
        %v205 = vld.sshfl [vmem:[#allocation1 + $0x10] sm:$0xff pattern:$0x75316420]
        %v206 = vld.sshfl [vmem:[#allocation1 + $0x18] sm:$0xff pattern:$0x75316420]
        %207 = vrot.lane.b32.xlu0 %v203, 127
        %v208 = vpop.permute.xlu0 %207
        %209 = vrot.lane.b32.xlu0 %v204, 127
        %v210 = vpop.permute.xlu0 %209
        %211 = vrot.lane.b32.xlu0 %v205, 127
        %v212 = vpop.permute.xlu0 %211
        %213 = vrot.lane.b32.xlu0 %v206, 127
        %v214 = vpop.permute.xlu0 %213
        %vm215 = vcmask 1039360
        %v216 = vsel %vm215, %v208, %v210
        %v217 = vsel %vm215, %v210, %v212
        %v218 = vsel %vm215, %v212, %v214
        %222 = vst [vmem:[#allocation1] ss:$2 sm:$0xff] %v186
        %s223 = scalar_lea.vmem [#allocation1], 16
        %224 = vst [vmem:[%s223] ss:$2 sm:$0xff] %v187
        %v225 = vld.sshfl [vmem:[#allocation1] sm:$0xff pattern:$0x75316420]
        %v226 = vld.sshfl [vmem:[#allocation1 + $0x8] sm:$0xff pattern:$0x75316420]
        %v227 = vld.sshfl [vmem:[#allocation1 + $0x10] sm:$0xff pattern:$0x75316420]
        %v228 = vld.sshfl [vmem:[#allocation1 + $0x18] sm:$0xff pattern:$0x75316420]
        %229 = vrot.lane.b32.xlu0 %v225, 126
        %v230 = vpop.permute.xlu0 %229
        %231 = vrot.lane.b32.xlu0 %v226, 126
        %v232 = vpop.permute.xlu0 %231
        %233 = vrot.lane.b32.xlu0 %v227, 126
        %v234 = vpop.permute.xlu0 %233
        %235 = vrot.lane.b32.xlu0 %v228, 126
        %v236 = vpop.permute.xlu0 %235
        %vm237 = vcmask 1031168
        %v238 = vsel %vm237, %v230, %v232
        %v239 = vsel %vm237, %v232, %v234
        %v240 = vsel %vm237, %v234, %v236
        %s244 = scalar_lea.vmem [#allocation1], 1
        %245 = vst [vmem:[%s244] ss:$2 sm:$0xff] %v186
        %s246 = scalar_lea.vmem [#allocation1], 17
        %247 = vst [vmem:[%s246] ss:$2 sm:$0xff] %v187
        %v248 = vld.sshfl [vmem:[#allocation1] sm:$0xff pattern:$0x75316420]
        %v249 = vld.sshfl [vmem:[#allocation1 + $0x8] sm:$0xff pattern:$0x75316420]
        %v250 = vld.sshfl [vmem:[#allocation1 + $0x10] sm:$0xff pattern:$0x75316420]
        %v251 = vld.sshfl [vmem:[#allocation1 + $0x18] sm:$0xff pattern:$0x75316420]
        %252 = vrot.lane.b32.xlu0 %v248, 125
        %v253 = vpop.permute.xlu0 %252
        %254 = vrot.lane.b32.xlu0 %v249, 125
        %v255 = vpop.permute.xlu0 %254
        %256 = vrot.lane.b32.xlu0 %v250, 125
        %v257 = vpop.permute.xlu0 %256
        %258 = vrot.lane.b32.xlu0 %v251, 125
        %v259 = vpop.permute.xlu0 %258
        %vm260 = vcmask 1022976
        %v261 = vsel %vm260, %v253, %v255
        %v262 = vsel %vm260, %v255, %v257
        %v263 = vsel %vm260, %v257, %v259
        %267 = vst [vmem:[#allocation1] ss:$2 sm:$0xff] %v186
        %s268 = scalar_lea.vmem [#allocation1], 16
        %269 = vst [vmem:[%s268] ss:$2 sm:$0xff] %v187
        %v270 = vld.sshfl [vmem:[#allocation1] sm:$0xff pattern:$0x75316420]
        %v271 = vld.sshfl [vmem:[#allocation1 + $0x8] sm:$0xff pattern:$0x75316420]
        %v272 = vld.sshfl [vmem:[#allocation1 + $0x10] sm:$0xff pattern:$0x75316420]
        %v273 = vld.sshfl [vmem:[#allocation1 + $0x18] sm:$0xff pattern:$0x75316420]
        %274 = vrot.lane.b32.xlu0 %v270, 124
        %v275 = vpop.permute.xlu0 %274
        %276 = vrot.lane.b32.xlu0 %v271, 124
        %v277 = vpop.permute.xlu0 %276
        %278 = vrot.lane.b32.xlu0 %v272, 124
        %v279 = vpop.permute.xlu0 %278
        %280 = vrot.lane.b32.xlu0 %v273, 124
        %v281 = vpop.permute.xlu0 %280
        %vm282 = vcmask 1014784
        %v283 = vsel %vm282, %v275, %v277
        %v284 = vsel %vm282, %v277, %v279
        %v285 = vsel %vm282, %v279, %v281
        %s289 = scalar_lea.vmem [#allocation1], 1
        %290 = vst [vmem:[%s289] ss:$2 sm:$0xff] %v186
        %s291 = scalar_lea.vmem [#allocation1], 17
        %292 = vst [vmem:[%s291] ss:$2 sm:$0xff] %v187
        %v293 = vld.sshfl [vmem:[#allocation1] sm:$0xff pattern:$0x75316420]
        %v294 = vld.sshfl [vmem:[#allocation1 + $0x8] sm:$0xff pattern:$0x75316420]
        %v295 = vld.sshfl [vmem:[#allocation1 + $0x10] sm:$0xff pattern:$0x75316420]
        %v296 = vld.sshfl [vmem:[#allocation1 + $0x18] sm:$0xff pattern:$0x75316420]
        %297 = vrot.lane.b32.xlu0 %v293, 104
        %v298 = vpop.permute.xlu0 %297
        %299 = vrot.lane.b32.xlu0 %v294, 104
        %v300 = vpop.permute.xlu0 %299
        %301 = vrot.lane.b32.xlu0 %v295, 104
        %v302 = vpop.permute.xlu0 %301
        %303 = vrot.lane.b32.xlu0 %v296, 104
        %v304 = vpop.permute.xlu0 %303
        %vm305 = vcmask 850944
        %v306 = vsel %vm305, %v298, %v300
        %v307 = vsel %vm305, %v300, %v302
        %v308 = vsel %vm305, %v302, %v304
        %312 = vst [vmem:[#allocation1] ss:$2 sm:$0xff] %v186
        %s313 = scalar_lea.vmem [#allocation1], 16
        %314 = vst [vmem:[%s313] ss:$2 sm:$0xff] %v187
        %v315 = vld.sshfl [vmem:[#allocation1] sm:$0xff pattern:$0x75316420]
        %v316 = vld.sshfl [vmem:[#allocation1 + $0x8] sm:$0xff pattern:$0x75316420]
        %v317 = vld.sshfl [vmem:[#allocation1 + $0x10] sm:$0xff pattern:$0x75316420]
        %v318 = vld.sshfl [vmem:[#allocation1 + $0x18] sm:$0xff pattern:$0x75316420]
        %319 = vrot.lane.b32.xlu0 %v315, 103
        %v320 = vpop.permute.xlu0 %319
        %321 = vrot.lane.b32.xlu0 %v316, 103
        %v322 = vpop.permute.xlu0 %321
        %323 = vrot.lane.b32.xlu0 %v317, 103
        %v324 = vpop.permute.xlu0 %323
        %325 = vrot.lane.b32.xlu0 %v318, 103
        %v326 = vpop.permute.xlu0 %325
        %vm327 = vcmask 842752
        %v328 = vsel %vm327, %v320, %v322
        %v329 = vsel %vm327, %v322, %v324
        %v330 = vsel %vm327, %v324, %v326
        %s334 = scalar_lea.vmem [#allocation1], 1
        %335 = vst [vmem:[%s334] ss:$2 sm:$0xff] %v186
        %s336 = scalar_lea.vmem [#allocation1], 17
        %337 = vst [vmem:[%s336] ss:$2 sm:$0xff] %v187
        %v338 = vld.sshfl [vmem:[#allocation1] sm:$0xff pattern:$0x75316420]
        %v339 = vld.sshfl [vmem:[#allocation1 + $0x8] sm:$0xff pattern:$0x75316420]
        %v340 = vld.sshfl [vmem:[#allocation1 + $0x10] sm:$0xff pattern:$0x75316420]
        %v341 = vld.sshfl [vmem:[#allocation1 + $0x18] sm:$0xff pattern:$0x75316420]
        %342 = vrot.lane.b32.xlu0 %v338, 102
        %v343 = vpop.permute.xlu0 %342
        %344 = vrot.lane.b32.xlu0 %v339, 102
        %v345 = vpop.permute.xlu0 %344
        %346 = vrot.lane.b32.xlu0 %v340, 102
        %v347 = vpop.permute.xlu0 %346
        %348 = vrot.lane.b32.xlu0 %v341, 102
        %v349 = vpop.permute.xlu0 %348
        %vm350 = vcmask 834560
        %v351 = vsel %vm350, %v343, %v345
        %v352 = vsel %vm350, %v345, %v347
        %v353 = vsel %vm350, %v347, %v349
        %357 = vst [vmem:[#allocation1] ss:$2 sm:$0xff] %v186
        %s358 = scalar_lea.vmem [#allocation1], 16
        %359 = vst [vmem:[%s358] ss:$2 sm:$0xff] %v187
        %v360 = vld.sshfl [vmem:[#allocation1] sm:$0xff pattern:$0x75316420]
        %v361 = vld.sshfl [vmem:[#allocation1 + $0x8] sm:$0xff pattern:$0x75316420]
        %v362 = vld.sshfl [vmem:[#allocation1 + $0x10] sm:$0xff pattern:$0x75316420]
        %v363 = vld.sshfl [vmem:[#allocation1 + $0x18] sm:$0xff pattern:$0x75316420]
        %364 = vrot.lane.b32.xlu0 %v360, 101
        %v365 = vpop.permute.xlu0 %364
        %366 = vrot.lane.b32.xlu0 %v361, 101
        %v367 = vpop.permute.xlu0 %366
        %368 = vrot.lane.b32.xlu0 %v362, 101
        %v369 = vpop.permute.xlu0 %368
        %370 = vrot.lane.b32.xlu0 %v363, 101
        %v371 = vpop.permute.xlu0 %370
        %vm372 = vcmask 826368
        %v373 = vsel %vm372, %v365, %v367
        %v374 = vsel %vm372, %v367, %v369
        %v375 = vsel %vm372, %v369, %v371
        %s379 = scalar_lea.vmem [#allocation1], 1
        %380 = vst [vmem:[%s379] ss:$2 sm:$0xff] %v186
        %s381 = scalar_lea.vmem [#allocation1], 17
        %382 = vst [vmem:[%s381] ss:$2 sm:$0xff] %v187
        %v383 = vld.sshfl [vmem:[#allocation1] sm:$0xff pattern:$0x75316420]
        %v384 = vld.sshfl [vmem:[#allocation1 + $0x8] sm:$0xff pattern:$0x75316420]
        %v385 = vld.sshfl [vmem:[#allocation1 + $0x10] sm:$0xff pattern:$0x75316420]
        %v386 = vld.sshfl [vmem:[#allocation1 + $0x18] sm:$0xff pattern:$0x75316420]
        %387 = vrot.lane.b32.xlu0 %v383, 100
        %v388 = vpop.permute.xlu0 %387
        %389 = vrot.lane.b32.xlu0 %v384, 100
        %v390 = vpop.permute.xlu0 %389
        %391 = vrot.lane.b32.xlu0 %v385, 100
        %v392 = vpop.permute.xlu0 %391
        %393 = vrot.lane.b32.xlu0 %v386, 100
        %v394 = vpop.permute.xlu0 %393
        %vm395 = vcmask 818176
        %v396 = vsel %vm395, %v388, %v390
        %v397 = vsel %vm395, %v390, %v392
        %v398 = vsel %vm395, %v392, %v394
        %402 = vst [vmem:[#allocation1] ss:$2 sm:$0xff] %v186
        %s403 = scalar_lea.vmem [#allocation1], 16
        %404 = vst [vmem:[%s403] ss:$2 sm:$0xff] %v187
        %v405 = vld.sshfl [vmem:[#allocation1] sm:$0xff pattern:$0x75316420]
        %v406 = vld.sshfl [vmem:[#allocation1 + $0x8] sm:$0xff pattern:$0x75316420]
        %v407 = vld.sshfl [vmem:[#allocation1 + $0x10] sm:$0xff pattern:$0x75316420]
        %v408 = vld.sshfl [vmem:[#allocation1 + $0x18] sm:$0xff pattern:$0x75316420]
        %409 = vrot.lane.b32.xlu0 %v405, 80
        %v410 = vpop.permute.xlu0 %409
        %411 = vrot.lane.b32.xlu0 %v406, 80
        %v412 = vpop.permute.xlu0 %411
        %413 = vrot.lane.b32.xlu0 %v407, 80
        %v414 = vpop.permute.xlu0 %413
        %415 = vrot.lane.b32.xlu0 %v408, 80
        %v416 = vpop.permute.xlu0 %415
        %vm417 = vcmask 654336
        %v418 = vsel %vm417, %v410, %v412
        %v419 = vsel %vm417, %v412, %v414
        %v420 = vsel %vm417, %v414, %v416
        %s424 = scalar_lea.vmem [#allocation1], 1
        %425 = vst [vmem:[%s424] ss:$2 sm:$0xff] %v186
        %s426 = scalar_lea.vmem [#allocation1], 17
        %427 = vst [vmem:[%s426] ss:$2 sm:$0xff] %v187
        %v428 = vld.sshfl [vmem:[#allocation1] sm:$0xff pattern:$0x75316420]
        %v429 = vld.sshfl [vmem:[#allocation1 + $0x8] sm:$0xff pattern:$0x75316420]
        %v430 = vld.sshfl [vmem:[#allocation1 + $0x10] sm:$0xff pattern:$0x75316420]
        %v431 = vld.sshfl [vmem:[#allocation1 + $0x18] sm:$0xff pattern:$0x75316420]
        %432 = vrot.lane.b32.xlu0 %v428, 79
        %v433 = vpop.permute.xlu0 %432
        %434 = vrot.lane.b32.xlu0 %v429, 79
        %v435 = vpop.permute.xlu0 %434
        %436 = vrot.lane.b32.xlu0 %v430, 79
        %v437 = vpop.permute.xlu0 %436
        %438 = vrot.lane.b32.xlu0 %v431, 79
        %v439 = vpop.permute.xlu0 %438
        %vm440 = vcmask 646144
        %v441 = vsel %vm440, %v433, %v435
        %v442 = vsel %vm440, %v435, %v437
        %v443 = vsel %vm440, %v437, %v439
        %447 = vst [vmem:[#allocation1] ss:$2 sm:$0xff] %v186
        %s448 = scalar_lea.vmem [#allocation1], 16
        %449 = vst [vmem:[%s448] ss:$2 sm:$0xff] %v187
        %v450 = vld.sshfl [vmem:[#allocation1] sm:$0xff pattern:$0x75316420]
        %v451 = vld.sshfl [vmem:[#allocation1 + $0x8] sm:$0xff pattern:$0x75316420]
        %v452 = vld.sshfl [vmem:[#allocation1 + $0x10] sm:$0xff pattern:$0x75316420]
        %v453 = vld.sshfl [vmem:[#allocation1 + $0x18] sm:$0xff pattern:$0x75316420]
        %454 = vrot.lane.b32.xlu0 %v450, 78
        %v455 = vpop.permute.xlu0 %454
        %456 = vrot.lane.b32.xlu0 %v451, 78
        %v457 = vpop.permute.xlu0 %456
        %458 = vrot.lane.b32.xlu0 %v452, 78
        %v459 = vpop.permute.xlu0 %458
        %460 = vrot.lane.b32.xlu0 %v453, 78
        %v461 = vpop.permute.xlu0 %460
        %vm462 = vcmask 637952
        %v463 = vsel %vm462, %v455, %v457
        %v464 = vsel %vm462, %v457, %v459
        %v465 = vsel %vm462, %v459, %v461
        %s469 = scalar_lea.vmem [#allocation1], 1
        %470 = vst [vmem:[%s469] ss:$2 sm:$0xff] %v186
        %s471 = scalar_lea.vmem [#allocation1], 17
        %472 = vst [vmem:[%s471] ss:$2 sm:$0xff] %v187
        %v473 = vld.sshfl [vmem:[#allocation1] sm:$0xff pattern:$0x75316420]
        %v474 = vld.sshfl [vmem:[#allocation1 + $0x8] sm:$0xff pattern:$0x75316420]
        %v475 = vld.sshfl [vmem:[#allocation1 + $0x10] sm:$0xff pattern:$0x75316420]
        %v476 = vld.sshfl [vmem:[#allocation1 + $0x18] sm:$0xff pattern:$0x75316420]
        %477 = vrot.lane.b32.xlu0 %v473, 77
        %v478 = vpop.permute.xlu0 %477
        %479 = vrot.lane.b32.xlu0 %v474, 77
        %v480 = vpop.permute.xlu0 %479
        %481 = vrot.lane.b32.xlu0 %v475, 77
        %v482 = vpop.permute.xlu0 %481
        %483 = vrot.lane.b32.xlu0 %v476, 77
        %v484 = vpop.permute.xlu0 %483
        %vm485 = vcmask 629760
        %v486 = vsel %vm485, %v478, %v480
        %v487 = vsel %vm485, %v480, %v482
        %v488 = vsel %vm485, %v482, %v484
        %492 = vst [vmem:[#allocation1] ss:$2 sm:$0xff] %v186
        %s493 = scalar_lea.vmem [#allocation1], 16
        %494 = vst [vmem:[%s493] ss:$2 sm:$0xff] %v187
        %v495 = vld.sshfl [vmem:[#allocation1] sm:$0xff pattern:$0x75316420]
        %v496 = vld.sshfl [vmem:[#allocation1 + $0x8] sm:$0xff pattern:$0x75316420]
        %v497 = vld.sshfl [vmem:[#allocation1 + $0x10] sm:$0xff pattern:$0x75316420]
        %v498 = vld.sshfl [vmem:[#allocation1 + $0x18] sm:$0xff pattern:$0x75316420]
        %499 = vrot.lane.b32.xlu0 %v495, 76
        %v500 = vpop.permute.xlu0 %499
        %501 = vrot.lane.b32.xlu0 %v496, 76
        %v502 = vpop.permute.xlu0 %501
        %503 = vrot.lane.b32.xlu0 %v497, 76
        %v504 = vpop.permute.xlu0 %503
        %505 = vrot.lane.b32.xlu0 %v498, 76
        %v506 = vpop.permute.xlu0 %505
        %vm507 = vcmask 621568
        %v508 = vsel %vm507, %v500, %v502
        %v509 = vsel %vm507, %v502, %v504
        %v510 = vsel %vm507, %v504, %v506
        %s514 = scalar_lea.vmem [#allocation1], 1
        %515 = vst [vmem:[%s514] ss:$2 sm:$0xff] %v186
        %s516 = scalar_lea.vmem [#allocation1], 17
        %517 = vst [vmem:[%s516] ss:$2 sm:$0xff] %v187
        %v518 = vld.sshfl [vmem:[#allocation1] sm:$0xff pattern:$0x75316420]
        %v519 = vld.sshfl [vmem:[#allocation1 + $0x8] sm:$0xff pattern:$0x75316420]
        %v520 = vld.sshfl [vmem:[#allocation1 + $0x10] sm:$0xff pattern:$0x75316420]
        %v521 = vld.sshfl [vmem:[#allocation1 + $0x18] sm:$0xff pattern:$0x75316420]
        %522 = vrot.lane.b32.xlu0 %v518, 56
        %v523 = vpop.permute.xlu0 %522
        %524 = vrot.lane.b32.xlu0 %v519, 56
        %v525 = vpop.permute.xlu0 %524
        %526 = vrot.lane.b32.xlu0 %v520, 56
        %v527 = vpop.permute.xlu0 %526
        %528 = vrot.lane.b32.xlu0 %v521, 56
        %v529 = vpop.permute.xlu0 %528
        %vm530 = vcmask 457728
        %v531 = vsel %vm530, %v523, %v525
        %v532 = vsel %vm530, %v525, %v527
        %v533 = vsel %vm530, %v527, %v529
        %vm537 = vcmask 1043456
        %v538 = vsel %vm537, %v193, %v216
        %v539 = vsel %vm537, %v194, %v217
        %v540 = vsel %vm537, %v195, %v218
        %v541 = vsel %vm537, %v238, %v261
        %v542 = vsel %vm537, %v239, %v262
        %v543 = vsel %vm537, %v240, %v263
        %v544 = vsel %vm537, %v283, %v306
        %v545 = vsel %vm537, %v284, %v307
        %v546 = vsel %vm537, %v285, %v308
        %v547 = vsel %vm537, %v328, %v351
        %v548 = vsel %vm537, %v329, %v352
        %v549 = vsel %vm537, %v330, %v353
        %v550 = vsel %vm537, %v373, %v396
        %v551 = vsel %vm537, %v374, %v397
        %v552 = vsel %vm537, %v375, %v398
        %v553 = vsel %vm537, %v418, %v441
        %v554 = vsel %vm537, %v419, %v442
        %v555 = vsel %vm537, %v420, %v443
        %v556 = vsel %vm537, %v463, %v486
        %v557 = vsel %vm537, %v464, %v487
        %v558 = vsel %vm537, %v465, %v488
        %v559 = vsel %vm537, %v508, %v531
        %v560 = vsel %vm537, %v509, %v532
        %v561 = vsel %vm537, %v510, %v533
        %562 = vst [vmem:[#allocation1] ss:$2 sm:$0xff] %v186
        %s563 = scalar_lea.vmem [#allocation1], 16
        %564 = vst [vmem:[%s563] ss:$2 sm:$0xff] %v187
        %v565 = vld.sshfl [vmem:[#allocation1] sm:$0xff pattern:$0x75316420]
        %v566 = vld.sshfl [vmem:[#allocation1 + $0x8] sm:$0xff pattern:$0x75316420]
        %v567 = vld.sshfl [vmem:[#allocation1 + $0x10] sm:$0xff pattern:$0x75316420]
        %v568 = vld.sshfl [vmem:[#allocation1 + $0x18] sm:$0xff pattern:$0x75316420]
        %s573 = scalar_lea.vmem [#allocation1], 1
        %574 = vst [vmem:[%s573] ss:$2 sm:$0xff] %v186
        %s575 = scalar_lea.vmem [#allocation1], 17
        %576 = vst [vmem:[%s575] ss:$2 sm:$0xff] %v187
        %v577 = vld.sshfl [vmem:[#allocation1] sm:$0xff pattern:$0x75316420]
        %v578 = vld.sshfl [vmem:[#allocation1 + $0x8] sm:$0xff pattern:$0x75316420]
        %v579 = vld.sshfl [vmem:[#allocation1 + $0x10] sm:$0xff pattern:$0x75316420]
        %v580 = vld.sshfl [vmem:[#allocation1 + $0x18] sm:$0xff pattern:$0x75316420]
        %581 = vrot.lane.b32.xlu0 %v577, 127
        %v582 = vpop.permute.xlu0 %581
        %583 = vrot.lane.b32.xlu0 %v578, 127
        %v584 = vpop.permute.xlu0 %583
        %585 = vrot.lane.b32.xlu0 %v579, 127
        %v586 = vpop.permute.xlu0 %585
        %587 = vrot.lane.b32.xlu0 %v580, 127
        %v588 = vpop.permute.xlu0 %587
        %v589 = vsel %vm215, %v582, %v584
        %v590 = vsel %vm215, %v584, %v586
        %v591 = vsel %vm215, %v586, %v588
        %596 = vst [vmem:[#allocation1] ss:$2 sm:$0xff] %v186
        %s597 = scalar_lea.vmem [#allocation1], 16
        %598 = vst [vmem:[%s597] ss:$2 sm:$0xff] %v187
        %v599 = vld.sshfl [vmem:[#allocation1] sm:$0xff pattern:$0x75316420]
        %v600 = vld.sshfl [vmem:[#allocation1 + $0x8] sm:$0xff pattern:$0x75316420]
        %v601 = vld.sshfl [vmem:[#allocation1 + $0x10] sm:$0xff pattern:$0x75316420]
        %v602 = vld.sshfl [vmem:[#allocation1 + $0x18] sm:$0xff pattern:$0x75316420]
        %603 = vrot.lane.b32.xlu0 %v599, 126
        %v604 = vpop.permute.xlu0 %603
        %605 = vrot.lane.b32.xlu0 %v600, 126
        %v606 = vpop.permute.xlu0 %605
        %607 = vrot.lane.b32.xlu0 %v601, 126
        %v608 = vpop.permute.xlu0 %607
        %609 = vrot.lane.b32.xlu0 %v602, 126
        %v610 = vpop.permute.xlu0 %609
        %v611 = vsel %vm237, %v604, %v606
        %v612 = vsel %vm237, %v606, %v608
        %v613 = vsel %vm237, %v608, %v610
        %s618 = scalar_lea.vmem [#allocation1], 1
        %619 = vst [vmem:[%s618] ss:$2 sm:$0xff] %v186
        %s620 = scalar_lea.vmem [#allocation1], 17
        %621 = vst [vmem:[%s620] ss:$2 sm:$0xff] %v187
        %v622 = vld.sshfl [vmem:[#allocation1] sm:$0xff pattern:$0x75316420]
        %v623 = vld.sshfl [vmem:[#allocation1 + $0x8] sm:$0xff pattern:$0x75316420]
        %v624 = vld.sshfl [vmem:[#allocation1 + $0x10] sm:$0xff pattern:$0x75316420]
        %v625 = vld.sshfl [vmem:[#allocation1 + $0x18] sm:$0xff pattern:$0x75316420]
        %626 = vrot.lane.b32.xlu0 %v622, 125
        %v627 = vpop.permute.xlu0 %626
        %628 = vrot.lane.b32.xlu0 %v623, 125
        %v629 = vpop.permute.xlu0 %628
        %630 = vrot.lane.b32.xlu0 %v624, 125
        %v631 = vpop.permute.xlu0 %630
        %632 = vrot.lane.b32.xlu0 %v625, 125
        %v633 = vpop.permute.xlu0 %632
        %v634 = vsel %vm260, %v627, %v629
        %v635 = vsel %vm260, %v629, %v631
        %v636 = vsel %vm260, %v631, %v633
        %641 = vst [vmem:[#allocation1] ss:$2 sm:$0xff] %v186
        %s642 = scalar_lea.vmem [#allocation1], 16
        %643 = vst [vmem:[%s642] ss:$2 sm:$0xff] %v187
        %v644 = vld.sshfl [vmem:[#allocation1] sm:$0xff pattern:$0x75316420]
        %v645 = vld.sshfl [vmem:[#allocation1 + $0x8] sm:$0xff pattern:$0x75316420]
        %v646 = vld.sshfl [vmem:[#allocation1 + $0x10] sm:$0xff pattern:$0x75316420]
        %v647 = vld.sshfl [vmem:[#allocation1 + $0x18] sm:$0xff pattern:$0x75316420]
        %648 = vrot.lane.b32.xlu0 %v644, 105
        %v649 = vpop.permute.xlu0 %648
        %650 = vrot.lane.b32.xlu0 %v645, 105
        %v651 = vpop.permute.xlu0 %650
        %652 = vrot.lane.b32.xlu0 %v646, 105
        %v653 = vpop.permute.xlu0 %652
        %654 = vrot.lane.b32.xlu0 %v647, 105
        %v655 = vpop.permute.xlu0 %654
        %vm656 = vcmask 859136
        %v657 = vsel %vm656, %v649, %v651
        %v658 = vsel %vm656, %v651, %v653
        %v659 = vsel %vm656, %v653, %v655
        %s664 = scalar_lea.vmem [#allocation1], 1
        %665 = vst [vmem:[%s664] ss:$2 sm:$0xff] %v186
        %s666 = scalar_lea.vmem [#allocation1], 17
        %667 = vst [vmem:[%s666] ss:$2 sm:$0xff] %v187
        %v668 = vld.sshfl [vmem:[#allocation1] sm:$0xff pattern:$0x75316420]
        %v669 = vld.sshfl [vmem:[#allocation1 + $0x8] sm:$0xff pattern:$0x75316420]
        %v670 = vld.sshfl [vmem:[#allocation1 + $0x10] sm:$0xff pattern:$0x75316420]
        %v671 = vld.sshfl [vmem:[#allocation1 + $0x18] sm:$0xff pattern:$0x75316420]
        %672 = vrot.lane.b32.xlu0 %v668, 104
        %v673 = vpop.permute.xlu0 %672
        %674 = vrot.lane.b32.xlu0 %v669, 104
        %v675 = vpop.permute.xlu0 %674
        %676 = vrot.lane.b32.xlu0 %v670, 104
        %v677 = vpop.permute.xlu0 %676
        %678 = vrot.lane.b32.xlu0 %v671, 104
        %v679 = vpop.permute.xlu0 %678
        %v680 = vsel %vm305, %v673, %v675
        %v681 = vsel %vm305, %v675, %v677
        %v682 = vsel %vm305, %v677, %v679
        %687 = vst [vmem:[#allocation1] ss:$2 sm:$0xff] %v186
        %s688 = scalar_lea.vmem [#allocation1], 16
        %689 = vst [vmem:[%s688] ss:$2 sm:$0xff] %v187
        %v690 = vld.sshfl [vmem:[#allocation1] sm:$0xff pattern:$0x75316420]
        %v691 = vld.sshfl [vmem:[#allocation1 + $0x8] sm:$0xff pattern:$0x75316420]
        %v692 = vld.sshfl [vmem:[#allocation1 + $0x10] sm:$0xff pattern:$0x75316420]
        %v693 = vld.sshfl [vmem:[#allocation1 + $0x18] sm:$0xff pattern:$0x75316420]
        %694 = vrot.lane.b32.xlu0 %v690, 103
        %v695 = vpop.permute.xlu0 %694
        %696 = vrot.lane.b32.xlu0 %v691, 103
        %v697 = vpop.permute.xlu0 %696
        %698 = vrot.lane.b32.xlu0 %v692, 103
        %v699 = vpop.permute.xlu0 %698
        %700 = vrot.lane.b32.xlu0 %v693, 103
        %v701 = vpop.permute.xlu0 %700
        %v702 = vsel %vm327, %v695, %v697
        %v703 = vsel %vm327, %v697, %v699
        %v704 = vsel %vm327, %v699, %v701
        %s709 = scalar_lea.vmem [#allocation1], 1
        %710 = vst [vmem:[%s709] ss:$2 sm:$0xff] %v186
        %s711 = scalar_lea.vmem [#allocation1], 17
        %712 = vst [vmem:[%s711] ss:$2 sm:$0xff] %v187
        %v713 = vld.sshfl [vmem:[#allocation1] sm:$0xff pattern:$0x75316420]
        %v714 = vld.sshfl [vmem:[#allocation1 + $0x8] sm:$0xff pattern:$0x75316420]
        %v715 = vld.sshfl [vmem:[#allocation1 + $0x10] sm:$0xff pattern:$0x75316420]
        %v716 = vld.sshfl [vmem:[#allocation1 + $0x18] sm:$0xff pattern:$0x75316420]
        %717 = vrot.lane.b32.xlu0 %v713, 102
        %v718 = vpop.permute.xlu0 %717
        %719 = vrot.lane.b32.xlu0 %v714, 102
        %v720 = vpop.permute.xlu0 %719
        %721 = vrot.lane.b32.xlu0 %v715, 102
        %v722 = vpop.permute.xlu0 %721
        %723 = vrot.lane.b32.xlu0 %v716, 102
        %v724 = vpop.permute.xlu0 %723
        %v725 = vsel %vm350, %v718, %v720
        %v726 = vsel %vm350, %v720, %v722
        %v727 = vsel %vm350, %v722, %v724
        %732 = vst [vmem:[#allocation1] ss:$2 sm:$0xff] %v186
        %s733 = scalar_lea.vmem [#allocation1], 16
        %734 = vst [vmem:[%s733] ss:$2 sm:$0xff] %v187
        %v735 = vld.sshfl [vmem:[#allocation1] sm:$0xff pattern:$0x75316420]
        %v736 = vld.sshfl [vmem:[#allocation1 + $0x8] sm:$0xff pattern:$0x75316420]
        %v737 = vld.sshfl [vmem:[#allocation1 + $0x10] sm:$0xff pattern:$0x75316420]
        %v738 = vld.sshfl [vmem:[#allocation1 + $0x18] sm:$0xff pattern:$0x75316420]
        %739 = vrot.lane.b32.xlu0 %v735, 101
        %v740 = vpop.permute.xlu0 %739
        %741 = vrot.lane.b32.xlu0 %v736, 101
        %v742 = vpop.permute.xlu0 %741
        %743 = vrot.lane.b32.xlu0 %v737, 101
        %v744 = vpop.permute.xlu0 %743
        %745 = vrot.lane.b32.xlu0 %v738, 101
        %v746 = vpop.permute.xlu0 %745
        %v747 = vsel %vm372, %v740, %v742
        %v748 = vsel %vm372, %v742, %v744
        %v749 = vsel %vm372, %v744, %v746
        %v754 = vsel %vm537, %v565, %v589
        %v755 = vsel %vm537, %v566, %v590
        %v756 = vsel %vm537, %v567, %v591
        %v757 = vsel %vm537, %v568, %v588
        %v758 = vsel %vm537, %v611, %v634
        %v759 = vsel %vm537, %v612, %v635
        %v760 = vsel %vm537, %v613, %v636
        %v761 = vsel %vm537, %v610, %v633
        %v762 = vsel %vm537, %v657, %v680
        %v763 = vsel %vm537, %v658, %v681
        %v764 = vsel %vm537, %v659, %v682
        %v765 = vsel %vm537, %v655, %v679
        %v766 = vsel %vm537, %v702, %v725
        %v767 = vsel %vm537, %v703, %v726
        %v768 = vsel %vm537, %v704, %v727
        %v769 = vsel %vm537, %v701, %v724
        %v770 = vsel %vm537, %v747, 0.0
        %v771 = vsel %vm537, %v748, 0.0
        %v772 = vsel %vm537, %v749, 0.0
        %v773 = vsel %vm537, %v746, 0.0
        %795 = vrot.lane.b32.xlu0 %v754, 55
        %v796 = vpop.permute.xlu0 %795
        %797 = vrot.lane.b32.xlu0 %v755, 55
        %v798 = vpop.permute.xlu0 %797
        %799 = vrot.lane.b32.xlu0 %v756, 55
        %v800 = vpop.permute.xlu0 %799
        %801 = vrot.lane.b32.xlu0 %v757, 55
        %v802 = vpop.permute.xlu0 %801
        %803 = vrot.lane.b32.xlu0 %v758, 55
        %v804 = vpop.permute.xlu0 %803
        %805 = vrot.lane.b32.xlu0 %v759, 55
        %v806 = vpop.permute.xlu0 %805
        %807 = vrot.lane.b32.xlu0 %v760, 55
        %v808 = vpop.permute.xlu0 %807
        %809 = vrot.lane.b32.xlu0 %v761, 55
        %v810 = vpop.permute.xlu0 %809
        %811 = vrot.lane.b32.xlu0 %v762, 55
        %v812 = vpop.permute.xlu0 %811
        %813 = vrot.lane.b32.xlu0 %v763, 55
        %v814 = vpop.permute.xlu0 %813
        %815 = vrot.lane.b32.xlu0 %v764, 55
        %v816 = vpop.permute.xlu0 %815
        %817 = vrot.lane.b32.xlu0 %v765, 55
        %v818 = vpop.permute.xlu0 %817
        %819 = vrot.lane.b32.xlu0 %v766, 55
        %v820 = vpop.permute.xlu0 %819
        %821 = vrot.lane.b32.xlu0 %v767, 55
        %v822 = vpop.permute.xlu0 %821
        %823 = vrot.lane.b32.xlu0 %v768, 55
        %v824 = vpop.permute.xlu0 %823
        %825 = vrot.lane.b32.xlu0 %v769, 55
        %v826 = vpop.permute.xlu0 %825
        %827 = vrot.lane.b32.xlu0 %v770, 55
        %v828 = vpop.permute.xlu0 %827
        %829 = vrot.lane.b32.xlu0 %v771, 55
        %v830 = vpop.permute.xlu0 %829
        %831 = vrot.lane.b32.xlu0 %v772, 55
        %v832 = vpop.permute.xlu0 %831
        %833 = vrot.lane.b32.xlu0 %v773, 55
        %v834 = vpop.permute.xlu0 %833
        %835 = vrot.lane.b32.xlu0 0.0, 55
        %v836 = vpop.permute.xlu0 %835
        %vm837 = vcmask 449536
        %v838 = vsel %vm837, %v796, %v798
        %v839 = vsel %vm837, %v798, %v800
        %v840 = vsel %vm837, %v800, %v802
        %v841 = vsel %vm837, %v804, %v806
        %v842 = vsel %vm837, %v806, %v808
        %v843 = vsel %vm837, %v808, %v810
        %v844 = vsel %vm837, %v812, %v814
        %v845 = vsel %vm837, %v814, %v816
        %v846 = vsel %vm837, %v816, %v818
        %v847 = vsel %vm837, %v820, %v822
        %v848 = vsel %vm837, %v822, %v824
        %v849 = vsel %vm837, %v824, %v826
        %v850 = vsel %vm837, %v828, %v830
        %v851 = vsel %vm837, %v830, %v832
        %v852 = vsel %vm837, %v832, %v834
        %v869 = vld [vmem:[#allocation2] sm:$0xff]
        %v870 = vld [vmem:[#allocation2 + $0x8] sm:$0xff]
        %v871 = vld [vmem:[#allocation2 + $0x10] sm:$0xff]
        %v872 = vld [vmem:[#allocation2 + $0x18] sm:$0xff]
        %v873 = vld [vmem:[%s2] sm:$0xff]
        %v874 = vld [vmem:[%s2 + $0x8] sm:$0xff]
        %v875 = vld [vmem:[%s2 + $0x10] sm:$0xff]
        %v876 = vld [vmem:[%s2 + $0x18] sm:$0xff]
        %878 = vset.pattern.permute.xlu0 0
        %879 = vperm.xlu0 %878, %v873
        %v880 = vpop.permute.xlu0 %879
        %883 = vset.pattern.permute.xlu0 0
        %884 = vperm.xlu0 %883, %v874
        %v885 = vpop.permute.xlu0 %884
        %888 = vset.pattern.permute.xlu0 0
        %889 = vperm.xlu0 %888, %v875
        %v890 = vpop.permute.xlu0 %889
        %893 = vset.pattern.permute.xlu0 0
        %894 = vperm.xlu0 %893, %v876
        %v895 = vpop.permute.xlu0 %894
        %897 = vmatpush.msra.mxu0 %v836
        %898 = vmatpush.msra.mxu0 %v836
        %899 = vmatpush.msra.mxu0 %v836
        %900 = vmatpush.msra.mxu0 %v850
        %901 = vmatpush.msra.mxu0 %v847
        %902 = vmatpush.msra.mxu0 %v844
        %903 = vmatpush.msra.mxu0 %v841
        %904 = vmatpush.msra.mxu0 %v838
        %905 = vmatpush.msra.mxu0 %v559
        %906 = vmatpush.msra.mxu0 %v556
        %907 = vmatpush.msra.mxu0 %v553
        %908 = vmatpush.msra.mxu0 %v550
        %909 = vmatpush.msra.mxu0 %v547
        %910 = vmatpush.msra.mxu0 %v544
        %911 = vmatpush.msra.mxu0 %v541
        %912 = vmatpush.msra.mxu0 %v538
        %913 = vmatmul.f32.gmra.mxu0 %v869
        %v914 = vpop.f32.mrf.mxu0
        %v915 = vadd.f32 %v880, %v914
        %916 = vmatmul.f32.gmra.mxu0 %v870
        %v917 = vpop.f32.mrf.mxu0
        %v918 = vadd.f32 %v885, %v917
        %919 = vmatmul.f32.gmra.mxu0 %v871
        %v920 = vpop.f32.mrf.mxu0
        %v921 = vadd.f32 %v890, %v920
        %922 = vmatmul.f32.gmra.mxu0 %v872
        %v923 = vpop.f32.mrf.mxu0
        %v924 = vadd.f32 %v895, %v923
        %925 = vdwg.mxu0
        %926 = vmatpush.msra.mxu0 %v836
        %927 = vmatpush.msra.mxu0 %v836
        %928 = vmatpush.msra.mxu0 %v836
        %929 = vmatpush.msra.mxu0 %v851
        %930 = vmatpush.msra.mxu0 %v848
        %931 = vmatpush.msra.mxu0 %v845
        %932 = vmatpush.msra.mxu0 %v842
        %933 = vmatpush.msra.mxu0 %v839
        %934 = vmatpush.msra.mxu0 %v560
        %935 = vmatpush.msra.mxu0 %v557
        %936 = vmatpush.msra.mxu0 %v554
        %937 = vmatpush.msra.mxu0 %v551
        %938 = vmatpush.msra.mxu0 %v548
        %939 = vmatpush.msra.mxu0 %v545
        %940 = vmatpush.msra.mxu0 %v542
        %941 = vmatpush.msra.mxu0 %v539
        %942 = vmatmul.f32.gmra.mxu0 %v869
        %v943 = vpop.f32.mrf.mxu0
        %v944 = vadd.f32 %v880, %v943
        %945 = vmatmul.f32.gmra.mxu0 %v870
        %v946 = vpop.f32.mrf.mxu0
        %v947 = vadd.f32 %v885, %v946
        %948 = vmatmul.f32.gmra.mxu0 %v871
        %v949 = vpop.f32.mrf.mxu0
        %v950 = vadd.f32 %v890, %v949
        %951 = vmatmul.f32.gmra.mxu0 %v872
        %v952 = vpop.f32.mrf.mxu0
        %v953 = vadd.f32 %v895, %v952
        %954 = vdwg.mxu0
        %955 = vmatpush.msra.mxu0 %v836
        %956 = vmatpush.msra.mxu0 %v836
        %957 = vmatpush.msra.mxu0 %v836
        %958 = vmatpush.msra.mxu0 %v852
        %959 = vmatpush.msra.mxu0 %v849
        %960 = vmatpush.msra.mxu0 %v846
        %961 = vmatpush.msra.mxu0 %v843
        %962 = vmatpush.msra.mxu0 %v840
        %963 = vmatpush.msra.mxu0 %v561
        %964 = vmatpush.msra.mxu0 %v558
        %965 = vmatpush.msra.mxu0 %v555
        %966 = vmatpush.msra.mxu0 %v552
        %967 = vmatpush.msra.mxu0 %v549
        %968 = vmatpush.msra.mxu0 %v546
        %969 = vmatpush.msra.mxu0 %v543
        %970 = vmatpush.msra.mxu0 %v540
        %971 = vmatmul.f32.gmra.mxu0 %v869
        %v972 = vpop.f32.mrf.mxu0
        %v973 = vadd.f32 %v880, %v972
        %974 = vmatmul.f32.gmra.mxu0 %v870
        %v975 = vpop.f32.mrf.mxu0
        %v976 = vadd.f32 %v885, %v975
        %977 = vmatmul.f32.gmra.mxu0 %v871
        %v978 = vpop.f32.mrf.mxu0
        %v979 = vadd.f32 %v890, %v978
        %980 = vmatmul.f32.gmra.mxu0 %v872
        %v981 = vpop.f32.mrf.mxu0
        %v982 = vadd.f32 %v895, %v981
        %983 = vdwg.mxu0
        %984 = vst [vmem:[%s180] sm:$0xff] %v915
        %985 = vst [vmem:[%s180 + $0x8] sm:$0xff] %v944
        %986 = vst [vmem:[%s180 + $0x10] sm:$0xff] %v973
        %987 = vst [vmem:[%s180 + $0x18] sm:$0xff] %v918
        %988 = vst [vmem:[%s180 + $0x20] sm:$0xff] %v947
        %989 = vst [vmem:[%s180 + $0x28] sm:$0xff] %v976
        %990 = vst [vmem:[%s180 + $0x30] sm:$0xff] %v921
        %991 = vst [vmem:[%s180 + $0x38] sm:$0xff] %v950
        %992 = vst [vmem:[%s180 + $0x40] sm:$0xff] %v979
        %993 = vst [vmem:[%s180 + $0x48] sm:$0xff] %v924
        %994 = vst [vmem:[%s180 + $0x50] sm:$0xff] %v953
        %995 = vst [vmem:[%s180 + $0x58] sm:$0xff] %v982
        %s996 = sand.u32 %s94, 1
        %s997 = scalar_lea.sflag [#allocation4], %s996
        %s998 = sand.u32 %s94, 1
        %s999 = smul.addr %s998, 96
        %s1000 = scalar_lea.vmem [#allocation5], %s999
        // Predicated region
        $region37: #{tpu_custom_call.1} parent=31 // pred_check
          %p1001 = pneg %p104
        $region38: #{tpu_custom_call.1} parent=31 // pred_check_branch
          %1003 = sbr.rel (%p1001) target = $region40
        $region39: #{tpu_custom_call.1} parent=31 // pred_region
          %1005 = vsyncadd %s997, 0
          %s1006 = smul.addr %s18, 12
          %s1007 = smul.addr %s1006, 8
          %s1008 = scalar_lea.hbm %s3, %s1007
          %s1009 = sshll.u32 %s1000, 4
          %s1010 = int_to_ptr.vmem [resolvable:$true] %s1009
          %s1011 = sshll.u32 %s1008, 4
          %s1012 = int_to_ptr.hbm [resolvable:$true] %s1011
          %1017 = dma.vmem_to_hbm [thread:$0]  %s1010, 1536, %s1012, %s997, 384, 384, 24
        $region40: #{tpu_custom_call.1} parent=31 // pred_fallthru
          _
      $region32: #{tpu_custom_call.1} parent=5 // pred_fallthru
        _
      %p1018 = scmp.le.s32.totalorder 2, %s13
      // Predicated region
      $region41: #{tpu_custom_call.1} parent=5 // pred_check
        %p1019 = pneg %p1018
      $region42: #{tpu_custom_call.1} parent=5 // pred_check_branch
        %1021 = sbr.rel (%p1019) target = $region44
      $region43: #{tpu_custom_call.1} parent=5 // pred_region
        %s1022 = ssub.s32 %s13, 2
        // Predicated region
        $region45: #{tpu_custom_call.1} parent=43 // pred_check
          %p1023 = pneg %p110
        $region46: #{tpu_custom_call.1} parent=43 // pred_check_branch
          %1025 = sbr.rel (%p1023) target = $region48
        $region47: #{tpu_custom_call.1} parent=43 // pred_region
          %s1026 = sand.u32 %s95, 1
          %s1027 = scalar_lea.sflag [#allocation4], %s1026
          %s1028 = sand.u32 %s95, 1
          %s1029 = smul.addr %s1028, 96
          %s1030 = scalar_lea.vmem [#allocation5], %s1029
          %1032 = dma.done %s1027, 1536
        $region48: #{tpu_custom_call.1} parent=43 // pred_fallthru
          _
      $region44: #{tpu_custom_call.1} parent=5 // pred_fallthru
        _
    $region6: #{tpu_custom_call.1} parent=1 // loop_footer
      %s17 = sadd.s32 1, %s13
    $region7: #{tpu_custom_call.1} parent=1 // loop_footer_branch
      %12 = sbr.rel target = $region3
    $region8: #{tpu_custom_call.1} parent=1 // loop_exit
      _
    %1033 = vsyncpa [#allocation3], 1
    %s1034 = scalar_lea.sflag [#allocation3], 1
    %1035 = vsyncpa %s1034, 1
    %1036 = vsyncpa [#allocation4], 1
    %s1037 = scalar_lea.sflag [#allocation4], 1
    %1038 = vsyncpa %s1037, 1

</llo_original>
